<compile_context>
chip_gen: v7x
topology: tpu7x:2x2x1
jax: 0.10.0
libtpu: 0.0.40
codegen_flags: <defaults>
</compile_context>

<pallas_src>
import jax
import jax.numpy as jnp
from jax.experimental import pallas as pl
from jax.experimental.pallas import tpu as pltpu


def _maxout_kernel(scale_ref, x_ref, o_ref):
    # x_ref:     (row_tile, hw_tile)  lane-dense data tile
    # scale_ref: (row_tile, 2)        per-row [pos, neg] scales
    x = x_ref[...]
    s = scale_ref[...]
    pos = s[:, 0:1]
    neg = s[:, 1:2]
    # y = pos*relu(x) - neg*relu(-x)  ==  x * (pos if x >= 0 else neg)
    # (only difference vs the original form is the sign of zero for x == -0.0)
    o_ref[...] = x * jnp.where(x >= 0, pos, neg)


def _round_up(x, m):
    return ((x + m - 1) // m) * m


def _select_tiles(R, HW, itemsize, *, row_tile_max=1024, hw_tile_max=8192,
                  tile_bytes_max=4 * 1024 * 1024):
    """Pick (row_tile, hw_tile): sublane-full, lane-dense, within the byte budget."""
    sub = max(8, 32 // itemsize)      # dtype-aware sublane multiple (f32:8, bf16:16, int8:32)
    lane = 128

    row_tile = min(_round_up(R, sub), row_tile_max)
    hw_tile = min(_round_up(HW, lane), hw_tile_max)

    # Shrink to the byte budget: prefer shrinking rows first (keep stores lane-dense).
    while row_tile * hw_tile * itemsize > tile_bytes_max:
        if row_tile > sub:
            row_tile = _round_up(max(sub, row_tile // 2), sub)
        elif hw_tile > lane:
            hw_tile = _round_up(max(lane, hw_tile // 2), lane)
        else:
            break

    # v7x megacore: make sure mid/large activations give at least 2 blocks on one
    # parallel axis (harmless on single-TC v5e/v6e, pointless for tiny arrays).
    if pl.cdiv(R, row_tile) * pl.cdiv(HW, hw_tile) == 1 and \
            row_tile * hw_tile * itemsize >= (512 << 10):
        if hw_tile >= 2 * lane:
            hw_tile = _round_up(pl.cdiv(hw_tile, 2), lane)
        elif row_tile >= 2 * sub:
            row_tile = _round_up(pl.cdiv(row_tile, 2), sub)

    return row_tile, hw_tile


def maxout(x, pos_scale, neg_scale, *, donate_x=False):
    """x: (N, C, H, W); pos_scale/neg_scale: (1, C, 1, 1). Returns (N, C, H, W)."""
    N, C, H, W = x.shape
    HW = H * W
    R = N * C
    dtype = x.dtype
    itemsize = jnp.dtype(dtype).itemsize

    # Lane-dense 2D view: rows = (n, c), lanes = flattened spatial.  No padding —
    # ragged edge tiles are handled by Pallas with masked stores.
    x2 = x.reshape(R, HW)

    # Per-row [pos, neg] scales packed into one tiny (R, 2) array (single scale DMA
    # per row-block change instead of two).
    pos_rows = jnp.broadcast_to(pos_scale.reshape(1, C), (N, C)).reshape(R)
    neg_rows = jnp.broadcast_to(neg_scale.reshape(1, C), (N, C)).reshape(R)
    scale_rows = jnp.stack([pos_rows, neg_rows], axis=-1).astype(dtype)   # (R, 2)

    row_tile, hw_tile = _select_tiles(R, HW, itemsize)
    grid = (pl.cdiv(R, row_tile), pl.cdiv(HW, hw_tile))

    # VMEM budget: double-buffered data in + data out + scale tiles, plus margin.
    data_tile_bytes = row_tile * hw_tile * itemsize
    scale_tile_bytes = row_tile * 2 * itemsize
    footprint = 4 * data_tile_bytes + 2 * scale_tile_bytes
    vmem_limit = int(min(48 << 20, max(24 << 20, footprint + (4 << 20))))

    # Optional buffer donation (only beneficial if the caller actually donates x and
    # does not reuse it afterwards).
    io_aliases = {1: 0} if donate_x else {}

    out = pl.pallas_call(
        _maxout_kernel,
        out_shape=jax.ShapeDtypeStruct((R, HW), dtype),
        grid=grid,
        in_specs=[
            # Scales: block index only changes with the row axis -> re-DMA'd once per row tile.
            pl.BlockSpec((row_tile, 2), lambda i, j: (i, 0)),
            pl.BlockSpec((row_tile, hw_tile), lambda i, j: (i, j)),
        ],
        out_specs=pl.BlockSpec((row_tile, hw_tile), lambda i, j: (i, j)),
        compiler_params=pltpu.CompilerParams(
            dimension_semantics=("parallel", "parallel"),
            vmem_limit_bytes=vmem_limit,
        ),
        input_output_aliases=io_aliases,
    )(scale_rows, x2)

    return out.reshape(N, C, H, W)


if __name__ == "__main__":
    key = jax.random.PRNGKey(0)
    N, C, H, W = 2, 4, 16, 16

    # Deterministic parameter init matching Maxout.__init__ (neg_init=0.25, pos_init=1.0)
    neg_scale = 0.25 * jnp.ones((1, C, 1, 1), dtype=jnp.float32)
    pos_scale = 1.0 * jnp.ones((1, C, 1, 1), dtype=jnp.float32)

    x = jax.random.normal(key, (N, C, H, W), dtype=jnp.float32)

    y = maxout(x, pos_scale, neg_scale)
    y = jax.block_until_ready(y)

    # Pure-JAX reference check
    ref = pos_scale * jnp.maximum(x, 0.0) - neg_scale * jnp.maximum(-x, 0.0)
    assert y.shape == (N, C, H, W)
    assert jnp.allclose(y, ref, atol=1e-6, rtol=1e-6), "mismatch vs reference"

    print("KERNEL_OK")
</pallas_src>

<mosaic_0001>
module attributes {stable_mosaic.version = 11 : i64} {
  func.func @_maxout_kernel(%arg0: i32, %arg1: i32, %arg2: memref<8x2xf32, #tpu.memory_space<vmem>>, %arg3: memref<8x256xf32, #tpu.memory_space<vmem>>, %arg4: memref<8x256xf32, #tpu.memory_space<vmem>>) attributes {dimension_semantics = [#tpu.dimension_semantics<parallel>, #tpu.dimension_semantics<parallel>], iteration_bounds = array<i64: 1, 1>, scalar_prefetch = 0 : i64, scratch_operands = 0 : i64, tpu.core_type = #tpu.core_type<tc>, window_params = [{transform_indices = @transform_0, window_bounds = array<i64: 8, 2>}, {transform_indices = @transform_1, window_bounds = array<i64: 8, 256>}, {transform_indices = @transform_2, window_bounds = array<i64: 8, 256>}]} {
    %c0 = arith.constant 0 : index
    %c0_0 = arith.constant 0 : index
    %0 = vector.load %arg3[%c0, %c0_0] : memref<8x256xf32, #tpu.memory_space<vmem>>, vector<8x256xf32>
    %c0_1 = arith.constant 0 : index
    %c0_2 = arith.constant 0 : index
    %1 = vector.load %arg2[%c0_1, %c0_2] : memref<8x2xf32, #tpu.memory_space<vmem>>, vector<8x2xf32>
    %2 = vector.extract_strided_slice %1 {offsets = [0, 0], sizes = [8, 1], strides = [1, 1]} : vector<8x2xf32> to vector<8x1xf32>
    %3 = vector.extract_strided_slice %1 {offsets = [0, 1], sizes = [8, 1], strides = [1, 1]} : vector<8x2xf32> to vector<8x1xf32>
    %cst = arith.constant 0.000000e+00 : f32
    %4 = vector.broadcast %cst : f32 to vector<8x256xf32>
    %5 = arith.cmpf oge, %0, %4 : vector<8x256xf32>
    %6 = vector.shape_cast %2 : vector<8x1xf32> to vector<8x1xf32>
    %7 = vector.broadcast %6 : vector<8x1xf32> to vector<8x256xf32>
    %8 = vector.shape_cast %3 : vector<8x1xf32> to vector<8x1xf32>
    %9 = vector.broadcast %8 : vector<8x1xf32> to vector<8x256xf32>
    %10 = arith.select %5, %7, %9 : vector<8x256xi1>, vector<8x256xf32>
    %11 = arith.mulf %0, %10 : vector<8x256xf32>
    %c0_3 = arith.constant 0 : index
    %c0_4 = arith.constant 0 : index
    %12 = vector.load %arg4[%c0_3, %c0_4] : memref<8x256xf32, #tpu.memory_space<vmem>>, vector<8x256xf32>
    tpu.vector_store %arg4[%c0_3, %c0_4], %11 {strides = array<i32>} : memref<8x256xf32, #tpu.memory_space<vmem>>, vector<8x256xf32>,
    return
  }
  func.func @transform_0(%arg0: i32, %arg1: i32) -> (i32, i32) {
    %c0_i32 = arith.constant 0 : i32
    %c0_i32_0 = arith.constant 0 : i32
    return %arg0, %c0_i32 : i32, i32
  }
  func.func @transform_1(%arg0: i32, %arg1: i32) -> (i32, i32) {
    %c0_i32 = arith.constant 0 : i32
    return %arg0, %arg1 : i32, i32
  }
  func.func @transform_2(%arg0: i32, %arg1: i32) -> (i32, i32) {
    %c0_i32 = arith.constant 0 : i32
    return %arg0, %arg1 : i32, i32
  }
}

</mosaic_0001>

<llo_original>
// kernel: tpu_custom_call.1
$region0: #{tpu_custom_call.1}
  #allocation0 [shape = 'u32[]', space=smem, size = 0x4, offset = 0x4, fixed_abs, tag = 'smem constant byte address 0x4 - core index']
  #allocation1 [shape = 'u32[144,128]{1,0:T(1,128)}', space=vmem, size = 0x12000, scoped, tag = 'internal scratch']
  %s0 = inlined_call_operand.vmem [shape: f32[8,2], index: 0, kind: input, shape index: {}]
  %s1 = inlined_call_operand.hbm [shape: f32[8,256], index: 1, kind: input, shape index: {}]
  %s2 = inlined_call_operand.hbm [shape: f32[8,256], index: 2, kind: output, shape index: {}]
  %s3 = sld [smem:[#allocation0]]
  $region22: #{tpu_custom_call.1} parent=0
    _
  %s5 = ssub.s32 1, %s3
  %s6 = scalar_select 0, %s5, %s3
  $region1: #{tpu_custom_call.1} parent=0
    #allocation2 [shape = 'u8[8192]{0}', space=vmem, size = 0x2000, scoped, tag = 'input window, operand 1, single buffered']
    #allocation3 [shape = 's32[1]{0}', space=sflag, size = 0x4, scoped, tag = 'scoped memory for tpu_custom_call.1']
    #allocation4 [shape = 's32[1]{0}', space=sflag, size = 0x4, scoped, tag = 'scoped memory for tpu_custom_call.1']
    #allocation5 [shape = 'u8[8192]{0}', space=vmem, size = 0x2000, scoped, tag = 'output window, operand 0, single buffered']
    %7 = vsyncpa [#allocation3], 0
    %8 = vsyncpa [#allocation4], 0
    // Predicated region
    $region2: #{tpu_custom_call.1} parent=1 // pred_check
      _
    $region3: #{tpu_custom_call.1} parent=1 // pred_check_branch
      %10 = sbr.rel (0) target = $region5
    $region4: #{tpu_custom_call.1} parent=1 // pred_region
      _
    $region5: #{tpu_custom_call.1} parent=1 // pred_fallthru
      _
    // Predicated region
    $region6: #{tpu_custom_call.1} parent=1 // pred_check
      _
    $region7: #{tpu_custom_call.1} parent=1 // pred_check_branch
      %12 = sbr.rel (0) target = $region9
    $region8: #{tpu_custom_call.1} parent=1 // pred_region
      %s14 = ssub.s32 256, 256
      %15 = vsyncadd [#allocation3], %s14
      %s17 = sshll.u32 [#allocation2], 4
      %s18 = int_to_ptr.vmem [resolvable:$true] %s17
      %20 = dma.hbm_to_vmem [thread:$0]  %s1, 256, %s18, [#allocation3]
    $region9: #{tpu_custom_call.1} parent=1 // pred_fallthru
      _
    // Predicated region
    $region10: #{tpu_custom_call.1} parent=1 // pred_check
      _
    $region11: #{tpu_custom_call.1} parent=1 // pred_check_branch
      %22 = sbr.rel (0) target = $region13
    $region12: #{tpu_custom_call.1} parent=1 // pred_region
      %23 = dma.done [#allocation3], 256
    $region13: #{tpu_custom_call.1} parent=1 // pred_fallthru
      _
    %v24 = vld [vmem:[#allocation2] sm:$0xff]
    %v25 = vld [vmem:[#allocation2 + $0x8] sm:$0xff]
    %v26 = vld [vmem:[%s0] sm:$0xff]
    %vm27 = vcmp.ge.f32.partialorder %v24, 0.0
    %vm28 = vcmp.ge.f32.partialorder %v25, 0.0
    %30 = vset.pattern.permute.xlu0 0
    %31 = vperm.xlu0 %30, %v26
    %v32 = vpop.permute.xlu0 %31
    %34 = vset.pattern.permute.xlu0 1
    %35 = vperm.xlu0 %34, %v26
    %v36 = vpop.permute.xlu0 %35
    %v38 = vsel %vm27, %v32, %v36
    %v39 = vsel %vm28, %v32, %v36
    %v40 = vmul.f32 %v24, %v38
    %v41 = vmul.f32 %v25, %v39
    %42 = vst [vmem:[#allocation5] sm:$0xff] %v40
    %43 = vst [vmem:[#allocation5 + $0x8] sm:$0xff] %v41
    // Predicated region
    $region14: #{tpu_custom_call.1} parent=1 // pred_check
      _
    $region15: #{tpu_custom_call.1} parent=1 // pred_check_branch
      %45 = sbr.rel (0) target = $region17
    $region16: #{tpu_custom_call.1} parent=1 // pred_region
      %s47 = ssub.s32 256, 256
      %48 = vsyncadd [#allocation4], %s47
      %s50 = sshll.u32 [#allocation5], 4
      %s51 = int_to_ptr.vmem [resolvable:$true] %s50
      %53 = dma.vmem_to_hbm [thread:$0]  %s51, 256, %s2, [#allocation4]
    $region17: #{tpu_custom_call.1} parent=1 // pred_fallthru
      _
    // Predicated region
    $region18: #{tpu_custom_call.1} parent=1 // pred_check
      _
    $region19: #{tpu_custom_call.1} parent=1 // pred_check_branch
      %55 = sbr.rel (0) target = $region21
    $region20: #{tpu_custom_call.1} parent=1 // pred_region
      %56 = dma.done [#allocation4], 256
    $region21: #{tpu_custom_call.1} parent=1 // pred_fallthru
      _
    %57 = vsyncpa [#allocation3], 1
    %58 = vsyncpa [#allocation4], 1

</llo_original>
